<compile_context>
chip_gen: v7x
topology: tpu7x:2x2x1
jax: 0.10.0
libtpu: 0.0.40
codegen_flags: <defaults>
</compile_context>

<pallas_src>
import functools
import math

import jax
import jax.numpy as jnp
from jax.experimental import pallas as pl
from jax.experimental.pallas import tpu as pltpu


def _round_up(x, m):
    return ((x + m - 1) // m) * m


# Tile caps (multiples of 256 for the v6e/v7x 2x256x256 MXU); the planner drops
# to the smallest 128-multiple that covers a dim when that is smaller.
_TM_CAP = 512
_TN_CAP = 1024
_TK_CAP = 1024


def _plan_nk(in_features, out_features, tn_cap=_TN_CAP, tk_cap=_TK_CAP):
    """Returns (tn, N_pad, tk, K_pad); depends only on the weight shape."""
    n128 = _round_up(out_features, 128)
    k128 = _round_up(in_features, 128)
    if n128 <= tn_cap:
        tn, n_pad = n128, n128
    else:
        tn, n_pad = tn_cap, _round_up(out_features, tn_cap)
    if k128 <= tk_cap:
        tk, k_pad = k128, k128
    else:
        tk, k_pad = tk_cap, _round_up(in_features, tk_cap)
    return tn, n_pad, tk, k_pad


def _plan_m(batch, tm_cap=_TM_CAP):
    """Returns (tm, M_pad). Single M block whenever the batch fits the cap."""
    m8 = _round_up(batch, 8)
    if m8 <= tm_cap:
        return m8, m8
    return tm_cap, _round_up(batch, tm_cap)


def pack_owm_fc_weight(w):
    """One-time prep of a native (out_features, in_features) Linear weight.

    Transposes to (in, out) and zero-pads to (K_pad, N_pad) so the kernel's RHS
    block is a plain (tk, tn) tile: no in-kernel transpose, no per-call padding.
    """
    out_features, in_features = w.shape
    _, n_pad, _, k_pad = _plan_nk(in_features, out_features)
    wt = w.T
    if (k_pad, n_pad) != (in_features, out_features):
        wt = jnp.pad(wt, ((0, k_pad - in_features), (0, n_pad - out_features)))
    return wt


def _fc_kernel(x_ref, w_ref, o_ref, *, precision):
    """One (tm, tn) output tile, accumulated in place over the K grid axis.

    x_ref: (tm, tk) activation tile
    w_ref: (tk, tn) pre-transposed weight tile
    o_ref: (tm, tn) f32 output tile, resident across K (acts as accumulator)
    """
    @pl.when(pl.program_id(2) == 0)
    def _():
        o_ref[...] = jnp.zeros_like(o_ref)

    o_ref[...] += jnp.dot(
        x_ref[...],
        w_ref[...],
        preferred_element_type=jnp.float32,
        precision=precision,
    )


def owm_fc_block_forward(x, w_packed, out_features, *,
                         precision=jax.lax.Precision.HIGHEST):
    """Forward of OWM_FC_block: out = x @ W.T (W supplied pre-packed).

    Args:
      x: (batch, in_features) float32.
      w_packed: (K_pad, N_pad) float32 from pack_owm_fc_weight.
      out_features: logical output width (<= N_pad).
      precision: MXU precision. HIGHEST ~matches PyTorch f32 Linear numerics;
        jax.lax.Precision.DEFAULT gives the fast bf16-pass MXU path.

    Returns:
      (batch, out_features) float32.
    """
    batch, in_features = x.shape
    tn, n_pad, tk, k_pad = _plan_nk(in_features, out_features)
    assert w_packed.shape == (k_pad, n_pad), (
        "w_packed does not match this (in_features, out_features); "
        "re-run pack_owm_fc_weight")

    tm, m_pad = _plan_m(batch)

    x_p = x
    if (m_pad, k_pad) != (batch, in_features):
        x_p = jnp.pad(x, ((0, m_pad - batch), (0, k_pad - in_features)))

    # N-blocks lead so v7x megacore sharding splits the weight stream along N.
    grid = (n_pad // tn, m_pad // tm, k_pad // tk)

    out_p = pl.pallas_call(
        functools.partial(_fc_kernel, precision=precision),
        out_shape=jax.ShapeDtypeStruct((m_pad, n_pad), jnp.float32),
        grid_spec=pltpu.PrefetchScalarGridSpec(
            num_scalar_prefetch=0,
            grid=grid,
            in_specs=[
                # activations: (tm, tk) tile at block (i, k)
                pl.BlockSpec((tm, tk), lambda j, i, k: (i, k)),
                # pre-transposed weight: (tk, tn) tile at block (k, j)
                pl.BlockSpec((tk, tn), lambda j, i, k: (k, j)),
            ],
            # output block is k-invariant -> stays resident, used as accumulator
            out_specs=pl.BlockSpec((tm, tn), lambda j, i, k: (i, j)),
        ),
        compiler_params=pltpu.CompilerParams(
            dimension_semantics=("parallel", "parallel", "arbitrary"),
            vmem_limit_bytes=48 * 1024 * 1024,
        ),
    )(x_p, w_packed)

    if (m_pad, n_pad) != (batch, out_features):
        out_p = out_p[:batch, :out_features]
    return out_p


def init_owm_fc_block_params(key, in_features, out_features):
    """Deterministic parameter init mirroring the PyTorch __init__."""
    # xavier_uniform_ with gain = calculate_gain('relu') = sqrt(2)
    gain = math.sqrt(2.0)
    bound = gain * math.sqrt(6.0 / (in_features + out_features))
    w = jax.random.uniform(
        key, (out_features, in_features), dtype=jnp.float32,
        minval=-bound, maxval=bound,
    )
    # P.weight = eye(in_features); unused in forward but kept for parity.
    p = jnp.eye(in_features, dtype=jnp.float32)
    return {"W": w, "W_packed": pack_owm_fc_weight(w), "P": p}


if __name__ == "__main__":
    key = jax.random.PRNGKey(0)
    k_x, k_w = jax.random.split(key)

    # Small shape consistent with the module.
    batch, in_features, out_features = 8, 32, 16
    x = jax.random.normal(k_x, (batch, in_features), dtype=jnp.float32)
    params = init_owm_fc_block_params(k_w, in_features, out_features)

    out = owm_fc_block_forward(x, params["W_packed"], out_features)
    out = jax.block_until_ready(out)

    ref = x @ params["W"].T
    assert out.shape == (batch, out_features)
    assert jnp.allclose(out, ref, atol=1e-5, rtol=1e-5), (
        float(jnp.max(jnp.abs(out - ref)))
    )

    # Larger, non-tile-aligned MNIST-ish shape: exercises the packed-weight
    # path, batch/feature padding + slicing, and the minimal-padding tile plan
    # (tm=304, tn=tk=896, single K step, W streamed from HBM exactly once).
    k_x2, k_w2 = jax.random.split(k_w)
    x2 = jax.random.normal(k_x2, (300, 784), dtype=jnp.float32)
    w2 = jax.random.normal(k_w2, (800, 784), dtype=jnp.float32) * 0.05
    w2_packed = pack_owm_fc_weight(w2)
    out2 = jax.block_until_ready(owm_fc_block_forward(x2, w2_packed, 800))
    ref2 = x2 @ w2.T
    assert out2.shape == (300, 800)
    assert jnp.allclose(out2, ref2, atol=1e-3, rtol=1e-4), (
        float(jnp.max(jnp.abs(out2 - ref2)))
    )

    print("KERNEL_OK")
</pallas_src>

<mosaic_0001>
module attributes {stable_mosaic.version = 11 : i64} {
  func.func @_fc_kernel(%arg0: i32, %arg1: i32, %arg2: i32, %arg3: memref<8x128xf32, #tpu.memory_space<vmem>>, %arg4: memref<128x128xf32, #tpu.memory_space<vmem>>, %arg5: memref<8x128xf32, #tpu.memory_space<vmem>>) attributes {dimension_semantics = [#tpu.dimension_semantics<parallel>, #tpu.dimension_semantics<parallel>, #tpu.dimension_semantics<arbitrary>], iteration_bounds = array<i64: 1, 1, 1>, scalar_prefetch = 0 : i64, scratch_operands = 0 : i64, tpu.core_type = #tpu.core_type<tc>, window_params = [{transform_indices = @transform_0, window_bounds = array<i64: 8, 128>}, {transform_indices = @transform_1, window_bounds = array<i64: 128, 128>}, {transform_indices = @transform_2, window_bounds = array<i64: 8, 128>}]} {
    %c0_i32 = arith.constant 0 : i32
    %0 = arith.cmpi eq, %arg2, %c0_i32 : i32
    %1 = arith.extui %0 : i1 to i32
    %c0_i32_0 = arith.constant 0 : i32
    %2 = arith.cmpi ne, %1, %c0_i32_0 : i32
    scf.if %2 {
      %cst_8 = arith.constant 0.000000e+00 : f32
      %9 = vector.broadcast %cst_8 : f32 to vector<8x128xf32>
      %c0_9 = arith.constant 0 : index
      %c0_10 = arith.constant 0 : index
      %10 = vector.load %arg5[%c0_9, %c0_10] : memref<8x128xf32, #tpu.memory_space<vmem>>, vector<8x128xf32>
      tpu.vector_store %arg5[%c0_9, %c0_10], %9 {strides = array<i32>} : memref<8x128xf32, #tpu.memory_space<vmem>>, vector<8x128xf32>,
    } else {
    }
    %c0 = arith.constant 0 : index
    %c0_1 = arith.constant 0 : index
    %3 = vector.load %arg5[%c0, %c0_1] : memref<8x128xf32, #tpu.memory_space<vmem>>, vector<8x128xf32>
    %c0_2 = arith.constant 0 : index
    %c0_3 = arith.constant 0 : index
    %4 = vector.load %arg3[%c0_2, %c0_3] : memref<8x128xf32, #tpu.memory_space<vmem>>, vector<8x128xf32>
    %c0_4 = arith.constant 0 : index
    %c0_5 = arith.constant 0 : index
    %5 = vector.load %arg4[%c0_4, %c0_5] : memref<128x128xf32, #tpu.memory_space<vmem>>, vector<128x128xf32>
    %cst = arith.constant dense<0.000000e+00> : vector<8x128xf32>
    %6 = tpu.matmul %4, %5, %cst {dimension_numbers = #tpu.dot_dimension_numbers<[1], [0], [0], [1], [0, 0, 1, 1], [], []>, precision = #tpu.contract_precision<fp32>} : vector<8x128xf32>, vector<128x128xf32>, vector<8x128xf32> -> vector<8x128xf32>
    %7 = arith.addf %3, %6 : vector<8x128xf32>
    %c0_6 = arith.constant 0 : index
    %c0_7 = arith.constant 0 : index
    %8 = vector.load %arg5[%c0_6, %c0_7] : memref<8x128xf32, #tpu.memory_space<vmem>>, vector<8x128xf32>
    tpu.vector_store %arg5[%c0_6, %c0_7], %7 {strides = array<i32>} : memref<8x128xf32, #tpu.memory_space<vmem>>, vector<8x128xf32>,
    return
  }
  func.func @transform_0(%arg0: i32, %arg1: i32, %arg2: i32) -> (i32, i32) {
    %c0_i32 = arith.constant 0 : i32
    return %arg1, %arg2 : i32, i32
  }
  func.func @transform_1(%arg0: i32, %arg1: i32, %arg2: i32) -> (i32, i32) {
    %c0_i32 = arith.constant 0 : i32
    return %arg2, %arg0 : i32, i32
  }
  func.func @transform_2(%arg0: i32, %arg1: i32, %arg2: i32) -> (i32, i32) {
    %c0_i32 = arith.constant 0 : i32
    return %arg1, %arg0 : i32, i32
  }
}

</mosaic_0001>

<llo_original>
// kernel: tpu_custom_call.1
$region0: #{tpu_custom_call.1}
  #allocation0 [shape = 'u32[]', space=smem, size = 0x4, offset = 0x4, fixed_abs, tag = 'smem constant byte address 0x4 - core index']
  #allocation1 [shape = 'u32[144,128]{1,0:T(1,128)}', space=vmem, size = 0x12000, scoped, tag = 'internal scratch']
  %s0 = inlined_call_operand.hbm [shape: f32[8,128], index: 0, kind: input, shape index: {}]
  %s1 = inlined_call_operand.hbm [shape: f32[128,128], index: 1, kind: input, shape index: {}]
  %s2 = inlined_call_operand.hbm [shape: f32[8,128], index: 2, kind: output, shape index: {}]
  %s3 = sld [smem:[#allocation0]]
  $region30: #{tpu_custom_call.1} parent=0
    _
  %s5 = ssub.s32 1, %s3
  %s6 = scalar_select 0, %s5, %s3
  $region1: #{tpu_custom_call.1} parent=0
    #allocation2 [shape = 'u8[4096]{0}', space=vmem, size = 0x1000, scoped, tag = 'input window, operand 0, single buffered']
    #allocation3 [shape = 's32[1]{0}', space=sflag, size = 0x4, scoped, tag = 'scoped memory for tpu_custom_call.1']
    #allocation4 [shape = 's32[1]{0}', space=sflag, size = 0x4, scoped, tag = 'scoped memory for tpu_custom_call.1']
    #allocation5 [shape = 'u8[65536]{0}', space=vmem, size = 0x10000, scoped, tag = 'input window, operand 1, single buffered']
    #allocation6 [shape = 's32[1]{0}', space=sflag, size = 0x4, scoped, tag = 'scoped memory for tpu_custom_call.1']
    #allocation7 [shape = 'u8[4096]{0}', space=vmem, size = 0x1000, scoped, tag = 'output window, operand 0, single buffered']
    %7 = vsyncpa [#allocation3], 0
    %8 = vsyncpa [#allocation6], 0
    %9 = vsyncpa [#allocation4], 0
    // Predicated region
    $region2: #{tpu_custom_call.1} parent=1 // pred_check
      _
    $region3: #{tpu_custom_call.1} parent=1 // pred_check_branch
      %11 = sbr.rel (0) target = $region5
    $region4: #{tpu_custom_call.1} parent=1 // pred_region
      %s13 = ssub.s32 128, 128
      %14 = vsyncadd [#allocation3], %s13
      %s16 = sshll.u32 [#allocation2], 4
      %s17 = int_to_ptr.vmem [resolvable:$true] %s16
      %19 = dma.hbm_to_vmem [thread:$0]  %s0, 128, %s17, [#allocation3]
    $region5: #{tpu_custom_call.1} parent=1 // pred_fallthru
      _
    // Predicated region
    $region6: #{tpu_custom_call.1} parent=1 // pred_check
      _
    $region7: #{tpu_custom_call.1} parent=1 // pred_check_branch
      %21 = sbr.rel (0) target = $region9
    $region8: #{tpu_custom_call.1} parent=1 // pred_region
      %s23 = ssub.s32 2048, 2048
      %24 = vsyncadd [#allocation6], %s23
      %s25 = sshll.u32 [#allocation5], 4
      %s26 = int_to_ptr.vmem [resolvable:$true] %s25
      %31 = dma.hbm_to_vmem [thread:$0]  %s1, 2048, %s26, [#allocation6], 128, 128, 8
    $region9: #{tpu_custom_call.1} parent=1 // pred_fallthru
      _
    // Predicated region
    $region10: #{tpu_custom_call.1} parent=1 // pred_check
      _
    $region11: #{tpu_custom_call.1} parent=1 // pred_check_branch
      %33 = sbr.rel (0) target = $region13
    $region12: #{tpu_custom_call.1} parent=1 // pred_region
      %34 = dma.done [#allocation3], 128
    $region13: #{tpu_custom_call.1} parent=1 // pred_fallthru
      _
    // Predicated region
    $region14: #{tpu_custom_call.1} parent=1 // pred_check
      _
    $region15: #{tpu_custom_call.1} parent=1 // pred_check_branch
      %36 = sbr.rel (0) target = $region17
    $region16: #{tpu_custom_call.1} parent=1 // pred_region
      %37 = dma.done [#allocation6], 2048
    $region17: #{tpu_custom_call.1} parent=1 // pred_fallthru
      _
    %p38 = scmp.eq.s32.totalorder 0, 0
    // Predicated region
    $region18: #{tpu_custom_call.1} parent=1 // pred_check
      %p39 = pneg %p38
    $region19: #{tpu_custom_call.1} parent=1 // pred_check_branch
      %41 = sbr.rel (%p39) target = $region21
    $region20: #{tpu_custom_call.1} parent=1 // pred_region
      %42 = vst [vmem:[#allocation7] sm:$0xff] 0.0
    $region21: #{tpu_custom_call.1} parent=1 // pred_fallthru
      _
    %v43 = vld [vmem:[#allocation7] sm:$0xff]
    %v44 = vld [vmem:[#allocation2] sm:$0xff]
    %v45 = vld [vmem:[#allocation5] sm:$0xff]
    %v46 = vld [vmem:[#allocation5 + $0x8] sm:$0xff]
    %v47 = vld [vmem:[#allocation5 + $0x10] sm:$0xff]
    %v48 = vld [vmem:[#allocation5 + $0x18] sm:$0xff]
    %v49 = vld [vmem:[#allocation5 + $0x20] sm:$0xff]
    %v50 = vld [vmem:[#allocation5 + $0x28] sm:$0xff]
    %v51 = vld [vmem:[#allocation5 + $0x30] sm:$0xff]
    %v52 = vld [vmem:[#allocation5 + $0x38] sm:$0xff]
    %v53 = vld [vmem:[#allocation5 + $0x40] sm:$0xff]
    %v54 = vld [vmem:[#allocation5 + $0x48] sm:$0xff]
    %v55 = vld [vmem:[#allocation5 + $0x50] sm:$0xff]
    %v56 = vld [vmem:[#allocation5 + $0x58] sm:$0xff]
    %v57 = vld [vmem:[#allocation5 + $0x60] sm:$0xff]
    %v58 = vld [vmem:[#allocation5 + $0x68] sm:$0xff]
    %v59 = vld [vmem:[#allocation5 + $0x70] sm:$0xff]
    %v60 = vld [vmem:[#allocation5 + $0x78] sm:$0xff]
    %61 = vmatprep.subr.mxu0 0.0
    %v62 = vand.u32 %v45, 4294901760
    %63 = vmatpush1.msra.mxu0 %v62
    %64 = vmatprep.subr.mxu0 0.0
    %v65 = vand.u32 %v46, 4294901760
    %66 = vmatpush1.msra.mxu0 %v65
    %67 = vmatprep.subr.mxu0 0.0
    %v68 = vand.u32 %v47, 4294901760
    %69 = vmatpush1.msra.mxu0 %v68
    %70 = vmatprep.subr.mxu0 0.0
    %v71 = vand.u32 %v48, 4294901760
    %72 = vmatpush1.msra.mxu0 %v71
    %73 = vmatprep.subr.mxu0 0.0
    %v74 = vand.u32 %v49, 4294901760
    %75 = vmatpush1.msra.mxu0 %v74
    %76 = vmatprep.subr.mxu0 0.0
    %v77 = vand.u32 %v50, 4294901760
    %78 = vmatpush1.msra.mxu0 %v77
    %79 = vmatprep.subr.mxu0 0.0
    %v80 = vand.u32 %v51, 4294901760
    %81 = vmatpush1.msra.mxu0 %v80
    %82 = vmatprep.subr.mxu0 0.0
    %v83 = vand.u32 %v52, 4294901760
    %84 = vmatpush1.msra.mxu0 %v83
    %85 = vmatprep.subr.mxu0 0.0
    %v86 = vand.u32 %v53, 4294901760
    %87 = vmatpush1.msra.mxu0 %v86
    %88 = vmatprep.subr.mxu0 0.0
    %v89 = vand.u32 %v54, 4294901760
    %90 = vmatpush1.msra.mxu0 %v89
    %91 = vmatprep.subr.mxu0 0.0
    %v92 = vand.u32 %v55, 4294901760
    %93 = vmatpush1.msra.mxu0 %v92
    %94 = vmatprep.subr.mxu0 0.0
    %v95 = vand.u32 %v56, 4294901760
    %96 = vmatpush1.msra.mxu0 %v95
    %97 = vmatprep.subr.mxu0 0.0
    %v98 = vand.u32 %v57, 4294901760
    %99 = vmatpush1.msra.mxu0 %v98
    %100 = vmatprep.subr.mxu0 0.0
    %v101 = vand.u32 %v58, 4294901760
    %102 = vmatpush1.msra.mxu0 %v101
    %103 = vmatprep.subr.mxu0 0.0
    %v104 = vand.u32 %v59, 4294901760
    %105 = vmatpush1.msra.mxu0 %v104
    %106 = vmatprep.subr.mxu0 0.0
    %v107 = vand.u32 %v60, 4294901760
    %108 = vmatpush1.msra.mxu0 %v107
    %109 = vmatprep.subr.mxu0 0.0
    %110 = vmatpush1.msra.mxu0 0.0
    %111 = vmatprep.subr.mxu0 0.0
    %112 = vmatpush1.msra.mxu0 0.0
    %113 = vmatprep.subr.mxu0 0.0
    %114 = vmatpush1.msra.mxu0 0.0
    %115 = vmatprep.subr.mxu0 0.0
    %116 = vmatpush1.msra.mxu0 0.0
    %117 = vmatprep.subr.mxu0 0.0
    %118 = vmatpush1.msra.mxu0 0.0
    %119 = vmatprep.subr.mxu0 0.0
    %120 = vmatpush1.msra.mxu0 0.0
    %121 = vmatprep.subr.mxu0 0.0
    %122 = vmatpush1.msra.mxu0 0.0
    %123 = vmatprep.subr.mxu0 0.0
    %124 = vmatpush1.msra.mxu0 0.0
    %125 = vmatprep.subr.mxu0 0.0
    %126 = vmatpush1.msra.mxu0 0.0
    %127 = vmatprep.subr.mxu0 0.0
    %128 = vmatpush1.msra.mxu0 0.0
    %129 = vmatprep.subr.mxu0 0.0
    %130 = vmatpush1.msra.mxu0 0.0
    %131 = vmatprep.subr.mxu0 0.0
    %132 = vmatpush1.msra.mxu0 0.0
    %133 = vmatprep.subr.mxu0 0.0
    %134 = vmatpush1.msra.mxu0 0.0
    %135 = vmatprep.subr.mxu0 0.0
    %136 = vmatpush1.msra.mxu0 0.0
    %137 = vmatprep.subr.mxu0 0.0
    %138 = vmatpush1.msra.mxu0 0.0
    %139 = vmatprep.subr.mxu0 0.0
    %140 = vmatpush1.msra.mxu0 0.0
    %141 = vmatprep.mubr.f32.mxu0 0.0
    %v142 = vand.u32 %v44, 4294901760
    %v143 = vsub.f32 %v44, %v142
    %v144 = vand.u32 %v143, 4294901760
    %v145 = vsub.f32 %v143, %v144
    %v146 = vand.u32 %v145, 4294901760
    %147 = vmatmul.mubr.f32.gmra.mrb[0].mxu0 %v146
    %v148 = vpop.f32.mrb[0].mxu0
    %v149 = vadd.f32 0.0, %v148
    %v150 = vpop.f32.mrb[0].mxu0
    %151 = vdwg.mxu0
    %152 = vmatprep.subr.mxu0 0.0
    %v153 = vand.u32 %v45, 4294901760
    %v154 = vsub.f32 %v45, %v153
    %v155 = vand.u32 %v154, 4294901760
    %v156 = vsub.f32 %v154, %v155
    %v157 = vand.u32 %v156, 4294901760
    %158 = vmatpush1.msra.mxu0 %v157
    %159 = vmatprep.subr.mxu0 0.0
    %v160 = vand.u32 %v46, 4294901760
    %v161 = vsub.f32 %v46, %v160
    %v162 = vand.u32 %v161, 4294901760
    %v163 = vsub.f32 %v161, %v162
    %v164 = vand.u32 %v163, 4294901760
    %165 = vmatpush1.msra.mxu0 %v164
    %166 = vmatprep.subr.mxu0 0.0
    %v167 = vand.u32 %v47, 4294901760
    %v168 = vsub.f32 %v47, %v167
    %v169 = vand.u32 %v168, 4294901760
    %v170 = vsub.f32 %v168, %v169
    %v171 = vand.u32 %v170, 4294901760
    %172 = vmatpush1.msra.mxu0 %v171
    %173 = vmatprep.subr.mxu0 0.0
    %v174 = vand.u32 %v48, 4294901760
    %v175 = vsub.f32 %v48, %v174
    %v176 = vand.u32 %v175, 4294901760
    %v177 = vsub.f32 %v175, %v176
    %v178 = vand.u32 %v177, 4294901760
    %179 = vmatpush1.msra.mxu0 %v178
    %180 = vmatprep.subr.mxu0 0.0
    %v181 = vand.u32 %v49, 4294901760
    %v182 = vsub.f32 %v49, %v181
    %v183 = vand.u32 %v182, 4294901760
    %v184 = vsub.f32 %v182, %v183
    %v185 = vand.u32 %v184, 4294901760
    %186 = vmatpush1.msra.mxu0 %v185
    %187 = vmatprep.subr.mxu0 0.0
    %v188 = vand.u32 %v50, 4294901760
    %v189 = vsub.f32 %v50, %v188
    %v190 = vand.u32 %v189, 4294901760
    %v191 = vsub.f32 %v189, %v190
    %v192 = vand.u32 %v191, 4294901760
    %193 = vmatpush1.msra.mxu0 %v192
    %194 = vmatprep.subr.mxu0 0.0
    %v195 = vand.u32 %v51, 4294901760
    %v196 = vsub.f32 %v51, %v195
    %v197 = vand.u32 %v196, 4294901760
    %v198 = vsub.f32 %v196, %v197
    %v199 = vand.u32 %v198, 4294901760
    %200 = vmatpush1.msra.mxu0 %v199
    %201 = vmatprep.subr.mxu0 0.0
    %v202 = vand.u32 %v52, 4294901760
    %v203 = vsub.f32 %v52, %v202
    %v204 = vand.u32 %v203, 4294901760
    %v205 = vsub.f32 %v203, %v204
    %v206 = vand.u32 %v205, 4294901760
    %207 = vmatpush1.msra.mxu0 %v206
    %208 = vmatprep.subr.mxu0 0.0
    %v209 = vand.u32 %v53, 4294901760
    %v210 = vsub.f32 %v53, %v209
    %v211 = vand.u32 %v210, 4294901760
    %v212 = vsub.f32 %v210, %v211
    %v213 = vand.u32 %v212, 4294901760
    %214 = vmatpush1.msra.mxu0 %v213
    %215 = vmatprep.subr.mxu0 0.0
    %v216 = vand.u32 %v54, 4294901760
    %v217 = vsub.f32 %v54, %v216
    %v218 = vand.u32 %v217, 4294901760
    %v219 = vsub.f32 %v217, %v218
    %v220 = vand.u32 %v219, 4294901760
    %221 = vmatpush1.msra.mxu0 %v220
    %222 = vmatprep.subr.mxu0 0.0
    %v223 = vand.u32 %v55, 4294901760
    %v224 = vsub.f32 %v55, %v223
    %v225 = vand.u32 %v224, 4294901760
    %v226 = vsub.f32 %v224, %v225
    %v227 = vand.u32 %v226, 4294901760
    %228 = vmatpush1.msra.mxu0 %v227
    %229 = vmatprep.subr.mxu0 0.0
    %v230 = vand.u32 %v56, 4294901760
    %v231 = vsub.f32 %v56, %v230
    %v232 = vand.u32 %v231, 4294901760
    %v233 = vsub.f32 %v231, %v232
    %v234 = vand.u32 %v233, 4294901760
    %235 = vmatpush1.msra.mxu0 %v234
    %236 = vmatprep.subr.mxu0 0.0
    %v237 = vand.u32 %v57, 4294901760
    %v238 = vsub.f32 %v57, %v237
    %v239 = vand.u32 %v238, 4294901760
    %v240 = vsub.f32 %v238, %v239
    %v241 = vand.u32 %v240, 4294901760
    %242 = vmatpush1.msra.mxu0 %v241
    %243 = vmatprep.subr.mxu0 0.0
    %v244 = vand.u32 %v58, 4294901760
    %v245 = vsub.f32 %v58, %v244
    %v246 = vand.u32 %v245, 4294901760
    %v247 = vsub.f32 %v245, %v246
    %v248 = vand.u32 %v247, 4294901760
    %249 = vmatpush1.msra.mxu0 %v248
    %250 = vmatprep.subr.mxu0 0.0
    %v251 = vand.u32 %v59, 4294901760
    %v252 = vsub.f32 %v59, %v251
    %v253 = vand.u32 %v252, 4294901760
    %v254 = vsub.f32 %v252, %v253
    %v255 = vand.u32 %v254, 4294901760
    %256 = vmatpush1.msra.mxu0 %v255
    %257 = vmatprep.subr.mxu0 0.0
    %v258 = vand.u32 %v60, 4294901760
    %v259 = vsub.f32 %v60, %v258
    %v260 = vand.u32 %v259, 4294901760
    %v261 = vsub.f32 %v259, %v260
    %v262 = vand.u32 %v261, 4294901760
    %263 = vmatpush1.msra.mxu0 %v262
    %264 = vmatprep.subr.mxu0 0.0
    %265 = vmatpush1.msra.mxu0 0.0
    %266 = vmatprep.subr.mxu0 0.0
    %267 = vmatpush1.msra.mxu0 0.0
    %268 = vmatprep.subr.mxu0 0.0
    %269 = vmatpush1.msra.mxu0 0.0
    %270 = vmatprep.subr.mxu0 0.0
    %271 = vmatpush1.msra.mxu0 0.0
    %272 = vmatprep.subr.mxu0 0.0
    %273 = vmatpush1.msra.mxu0 0.0
    %274 = vmatprep.subr.mxu0 0.0
    %275 = vmatpush1.msra.mxu0 0.0
    %276 = vmatprep.subr.mxu0 0.0
    %277 = vmatpush1.msra.mxu0 0.0
    %278 = vmatprep.subr.mxu0 0.0
    %279 = vmatpush1.msra.mxu0 0.0
    %280 = vmatprep.subr.mxu0 0.0
    %281 = vmatpush1.msra.mxu0 0.0
    %282 = vmatprep.subr.mxu0 0.0
    %283 = vmatpush1.msra.mxu0 0.0
    %284 = vmatprep.subr.mxu0 0.0
    %285 = vmatpush1.msra.mxu0 0.0
    %286 = vmatprep.subr.mxu0 0.0
    %287 = vmatpush1.msra.mxu0 0.0
    %288 = vmatprep.subr.mxu0 0.0
    %289 = vmatpush1.msra.mxu0 0.0
    %290 = vmatprep.subr.mxu0 0.0
    %291 = vmatpush1.msra.mxu0 0.0
    %292 = vmatprep.subr.mxu0 0.0
    %293 = vmatpush1.msra.mxu0 0.0
    %294 = vmatprep.subr.mxu0 0.0
    %295 = vmatpush1.msra.mxu0 0.0
    %296 = vmatprep.mubr.f32.mxu0 0.0
    %v297 = vand.u32 %v44, 4294901760
    %298 = vmatmul.mubr.f32.gmra.mrb[0].mxu0 %v297
    %v299 = vpop.f32.mrb[0].mxu0
    %v300 = vadd.f32 %v149, %v299
    %v301 = vpop.f32.mrb[0].mxu0
    %302 = vdwg.mxu0
    %303 = vmatprep.subr.mxu0 0.0
    %v304 = vand.u32 %v45, 4294901760
    %v305 = vsub.f32 %v45, %v304
    %306 = vmatpush1.msra.mxu0 %v305
    %307 = vmatprep.subr.mxu0 0.0
    %v308 = vand.u32 %v46, 4294901760
    %v309 = vsub.f32 %v46, %v308
    %310 = vmatpush1.msra.mxu0 %v309
    %311 = vmatprep.subr.mxu0 0.0
    %v312 = vand.u32 %v47, 4294901760
    %v313 = vsub.f32 %v47, %v312
    %314 = vmatpush1.msra.mxu0 %v313
    %315 = vmatprep.subr.mxu0 0.0
    %v316 = vand.u32 %v48, 4294901760
    %v317 = vsub.f32 %v48, %v316
    %318 = vmatpush1.msra.mxu0 %v317
    %319 = vmatprep.subr.mxu0 0.0
    %v320 = vand.u32 %v49, 4294901760
    %v321 = vsub.f32 %v49, %v320
    %322 = vmatpush1.msra.mxu0 %v321
    %323 = vmatprep.subr.mxu0 0.0
    %v324 = vand.u32 %v50, 4294901760
    %v325 = vsub.f32 %v50, %v324
    %326 = vmatpush1.msra.mxu0 %v325
    %327 = vmatprep.subr.mxu0 0.0
    %v328 = vand.u32 %v51, 4294901760
    %v329 = vsub.f32 %v51, %v328
    %330 = vmatpush1.msra.mxu0 %v329
    %331 = vmatprep.subr.mxu0 0.0
    %v332 = vand.u32 %v52, 4294901760
    %v333 = vsub.f32 %v52, %v332
    %334 = vmatpush1.msra.mxu0 %v333
    %335 = vmatprep.subr.mxu0 0.0
    %v336 = vand.u32 %v53, 4294901760
    %v337 = vsub.f32 %v53, %v336
    %338 = vmatpush1.msra.mxu0 %v337
    %339 = vmatprep.subr.mxu0 0.0
    %v340 = vand.u32 %v54, 4294901760
    %v341 = vsub.f32 %v54, %v340
    %342 = vmatpush1.msra.mxu0 %v341
    %343 = vmatprep.subr.mxu0 0.0
    %v344 = vand.u32 %v55, 4294901760
    %v345 = vsub.f32 %v55, %v344
    %346 = vmatpush1.msra.mxu0 %v345
    %347 = vmatprep.subr.mxu0 0.0
    %v348 = vand.u32 %v56, 4294901760
    %v349 = vsub.f32 %v56, %v348
    %350 = vmatpush1.msra.mxu0 %v349
    %351 = vmatprep.subr.mxu0 0.0
    %v352 = vand.u32 %v57, 4294901760
    %v353 = vsub.f32 %v57, %v352
    %354 = vmatpush1.msra.mxu0 %v353
    %355 = vmatprep.subr.mxu0 0.0
    %v356 = vand.u32 %v58, 4294901760
    %v357 = vsub.f32 %v58, %v356
    %358 = vmatpush1.msra.mxu0 %v357
    %359 = vmatprep.subr.mxu0 0.0
    %v360 = vand.u32 %v59, 4294901760
    %v361 = vsub.f32 %v59, %v360
    %362 = vmatpush1.msra.mxu0 %v361
    %363 = vmatprep.subr.mxu0 0.0
    %v364 = vand.u32 %v60, 4294901760
    %v365 = vsub.f32 %v60, %v364
    %366 = vmatpush1.msra.mxu0 %v365
    %367 = vmatprep.subr.mxu0 0.0
    %368 = vmatpush1.msra.mxu0 0.0
    %369 = vmatprep.subr.mxu0 0.0
    %370 = vmatpush1.msra.mxu0 0.0
    %371 = vmatprep.subr.mxu0 0.0
    %372 = vmatpush1.msra.mxu0 0.0
    %373 = vmatprep.subr.mxu0 0.0
    %374 = vmatpush1.msra.mxu0 0.0
    %375 = vmatprep.subr.mxu0 0.0
    %376 = vmatpush1.msra.mxu0 0.0
    %377 = vmatprep.subr.mxu0 0.0
    %378 = vmatpush1.msra.mxu0 0.0
    %379 = vmatprep.subr.mxu0 0.0
    %380 = vmatpush1.msra.mxu0 0.0
    %381 = vmatprep.subr.mxu0 0.0
    %382 = vmatpush1.msra.mxu0 0.0
    %383 = vmatprep.subr.mxu0 0.0
    %384 = vmatpush1.msra.mxu0 0.0
    %385 = vmatprep.subr.mxu0 0.0
    %386 = vmatpush1.msra.mxu0 0.0
    %387 = vmatprep.subr.mxu0 0.0
    %388 = vmatpush1.msra.mxu0 0.0
    %389 = vmatprep.subr.mxu0 0.0
    %390 = vmatpush1.msra.mxu0 0.0
    %391 = vmatprep.subr.mxu0 0.0
    %392 = vmatpush1.msra.mxu0 0.0
    %393 = vmatprep.subr.mxu0 0.0
    %394 = vmatpush1.msra.mxu0 0.0
    %395 = vmatprep.subr.mxu0 0.0
    %396 = vmatpush1.msra.mxu0 0.0
    %397 = vmatprep.subr.mxu0 0.0
    %398 = vmatpush1.msra.mxu0 0.0
    %399 = vmatprep.mubr.f32.mxu0 0.0
    %v400 = vand.u32 %v44, 4294901760
    %v401 = vsub.f32 %v44, %v400
    %402 = vmatmul.mubr.f32.gmra.mrb[0].mxu0 %v401
    %v403 = vpop.f32.mrb[0].mxu0
    %v404 = vadd.f32 %v300, %v403
    %v405 = vpop.f32.mrb[0].mxu0
    %406 = vdwg.mxu0
    %407 = vmatprep.subr.mxu0 0.0
    %v408 = vand.u32 %v45, 4294901760
    %409 = vmatpush1.msra.mxu0 %v408
    %410 = vmatprep.subr.mxu0 0.0
    %v411 = vand.u32 %v46, 4294901760
    %412 = vmatpush1.msra.mxu0 %v411
    %413 = vmatprep.subr.mxu0 0.0
    %v414 = vand.u32 %v47, 4294901760
    %415 = vmatpush1.msra.mxu0 %v414
    %416 = vmatprep.subr.mxu0 0.0
    %v417 = vand.u32 %v48, 4294901760
    %418 = vmatpush1.msra.mxu0 %v417
    %419 = vmatprep.subr.mxu0 0.0
    %v420 = vand.u32 %v49, 4294901760
    %421 = vmatpush1.msra.mxu0 %v420
    %422 = vmatprep.subr.mxu0 0.0
    %v423 = vand.u32 %v50, 4294901760
    %424 = vmatpush1.msra.mxu0 %v423
    %425 = vmatprep.subr.mxu0 0.0
    %v426 = vand.u32 %v51, 4294901760
    %427 = vmatpush1.msra.mxu0 %v426
    %428 = vmatprep.subr.mxu0 0.0
    %v429 = vand.u32 %v52, 4294901760
    %430 = vmatpush1.msra.mxu0 %v429
    %431 = vmatprep.subr.mxu0 0.0
    %v432 = vand.u32 %v53, 4294901760
    %433 = vmatpush1.msra.mxu0 %v432
    %434 = vmatprep.subr.mxu0 0.0
    %v435 = vand.u32 %v54, 4294901760
    %436 = vmatpush1.msra.mxu0 %v435
    %437 = vmatprep.subr.mxu0 0.0
    %v438 = vand.u32 %v55, 4294901760
    %439 = vmatpush1.msra.mxu0 %v438
    %440 = vmatprep.subr.mxu0 0.0
    %v441 = vand.u32 %v56, 4294901760
    %442 = vmatpush1.msra.mxu0 %v441
    %443 = vmatprep.subr.mxu0 0.0
    %v444 = vand.u32 %v57, 4294901760
    %445 = vmatpush1.msra.mxu0 %v444
    %446 = vmatprep.subr.mxu0 0.0
    %v447 = vand.u32 %v58, 4294901760
    %448 = vmatpush1.msra.mxu0 %v447
    %449 = vmatprep.subr.mxu0 0.0
    %v450 = vand.u32 %v59, 4294901760
    %451 = vmatpush1.msra.mxu0 %v450
    %452 = vmatprep.subr.mxu0 0.0
    %v453 = vand.u32 %v60, 4294901760
    %454 = vmatpush1.msra.mxu0 %v453
    %455 = vmatprep.subr.mxu0 0.0
    %456 = vmatpush1.msra.mxu0 0.0
    %457 = vmatprep.subr.mxu0 0.0
    %458 = vmatpush1.msra.mxu0 0.0
    %459 = vmatprep.subr.mxu0 0.0
    %460 = vmatpush1.msra.mxu0 0.0
    %461 = vmatprep.subr.mxu0 0.0
    %462 = vmatpush1.msra.mxu0 0.0
    %463 = vmatprep.subr.mxu0 0.0
    %464 = vmatpush1.msra.mxu0 0.0
    %465 = vmatprep.subr.mxu0 0.0
    %466 = vmatpush1.msra.mxu0 0.0
    %467 = vmatprep.subr.mxu0 0.0
    %468 = vmatpush1.msra.mxu0 0.0
    %469 = vmatprep.subr.mxu0 0.0
    %470 = vmatpush1.msra.mxu0 0.0
    %471 = vmatprep.subr.mxu0 0.0
    %472 = vmatpush1.msra.mxu0 0.0
    %473 = vmatprep.subr.mxu0 0.0
    %474 = vmatpush1.msra.mxu0 0.0
    %475 = vmatprep.subr.mxu0 0.0
    %476 = vmatpush1.msra.mxu0 0.0
    %477 = vmatprep.subr.mxu0 0.0
    %478 = vmatpush1.msra.mxu0 0.0
    %479 = vmatprep.subr.mxu0 0.0
    %480 = vmatpush1.msra.mxu0 0.0
    %481 = vmatprep.subr.mxu0 0.0
    %482 = vmatpush1.msra.mxu0 0.0
    %483 = vmatprep.subr.mxu0 0.0
    %484 = vmatpush1.msra.mxu0 0.0
    %485 = vmatprep.subr.mxu0 0.0
    %486 = vmatpush1.msra.mxu0 0.0
    %487 = vmatprep.mubr.f32.mxu0 0.0
    %v488 = vand.u32 %v44, 4294901760
    %v489 = vsub.f32 %v44, %v488
    %v490 = vand.u32 %v489, 4294901760
    %491 = vmatmul.mubr.f32.gmra.mrb[0].mxu0 %v490
    %v492 = vpop.f32.mrb[0].mxu0
    %v493 = vadd.f32 %v404, %v492
    %v494 = vpop.f32.mrb[0].mxu0
    %495 = vdwg.mxu0
    %496 = vmatprep.subr.mxu0 0.0
    %v497 = vand.u32 %v45, 4294901760
    %v498 = vsub.f32 %v45, %v497
    %v499 = vand.u32 %v498, 4294901760
    %500 = vmatpush1.msra.mxu0 %v499
    %501 = vmatprep.subr.mxu0 0.0
    %v502 = vand.u32 %v46, 4294901760
    %v503 = vsub.f32 %v46, %v502
    %v504 = vand.u32 %v503, 4294901760
    %505 = vmatpush1.msra.mxu0 %v504
    %506 = vmatprep.subr.mxu0 0.0
    %v507 = vand.u32 %v47, 4294901760
    %v508 = vsub.f32 %v47, %v507
    %v509 = vand.u32 %v508, 4294901760
    %510 = vmatpush1.msra.mxu0 %v509
    %511 = vmatprep.subr.mxu0 0.0
    %v512 = vand.u32 %v48, 4294901760
    %v513 = vsub.f32 %v48, %v512
    %v514 = vand.u32 %v513, 4294901760
    %515 = vmatpush1.msra.mxu0 %v514
    %516 = vmatprep.subr.mxu0 0.0
    %v517 = vand.u32 %v49, 4294901760
    %v518 = vsub.f32 %v49, %v517
    %v519 = vand.u32 %v518, 4294901760
    %520 = vmatpush1.msra.mxu0 %v519
    %521 = vmatprep.subr.mxu0 0.0
    %v522 = vand.u32 %v50, 4294901760
    %v523 = vsub.f32 %v50, %v522
    %v524 = vand.u32 %v523, 4294901760
    %525 = vmatpush1.msra.mxu0 %v524
    %526 = vmatprep.subr.mxu0 0.0
    %v527 = vand.u32 %v51, 4294901760
    %v528 = vsub.f32 %v51, %v527
    %v529 = vand.u32 %v528, 4294901760
    %530 = vmatpush1.msra.mxu0 %v529
    %531 = vmatprep.subr.mxu0 0.0
    %v532 = vand.u32 %v52, 4294901760
    %v533 = vsub.f32 %v52, %v532
    %v534 = vand.u32 %v533, 4294901760
    %535 = vmatpush1.msra.mxu0 %v534
    %536 = vmatprep.subr.mxu0 0.0
    %v537 = vand.u32 %v53, 4294901760
    %v538 = vsub.f32 %v53, %v537
    %v539 = vand.u32 %v538, 4294901760
    %540 = vmatpush1.msra.mxu0 %v539
    %541 = vmatprep.subr.mxu0 0.0
    %v542 = vand.u32 %v54, 4294901760
    %v543 = vsub.f32 %v54, %v542
    %v544 = vand.u32 %v543, 4294901760
    %545 = vmatpush1.msra.mxu0 %v544
    %546 = vmatprep.subr.mxu0 0.0
    %v547 = vand.u32 %v55, 4294901760
    %v548 = vsub.f32 %v55, %v547
    %v549 = vand.u32 %v548, 4294901760
    %550 = vmatpush1.msra.mxu0 %v549
    %551 = vmatprep.subr.mxu0 0.0
    %v552 = vand.u32 %v56, 4294901760
    %v553 = vsub.f32 %v56, %v552
    %v554 = vand.u32 %v553, 4294901760
    %555 = vmatpush1.msra.mxu0 %v554
    %556 = vmatprep.subr.mxu0 0.0
    %v557 = vand.u32 %v57, 4294901760
    %v558 = vsub.f32 %v57, %v557
    %v559 = vand.u32 %v558, 4294901760
    %560 = vmatpush1.msra.mxu0 %v559
    %561 = vmatprep.subr.mxu0 0.0
    %v562 = vand.u32 %v58, 4294901760
    %v563 = vsub.f32 %v58, %v562
    %v564 = vand.u32 %v563, 4294901760
    %565 = vmatpush1.msra.mxu0 %v564
    %566 = vmatprep.subr.mxu0 0.0
    %v567 = vand.u32 %v59, 4294901760
    %v568 = vsub.f32 %v59, %v567
    %v569 = vand.u32 %v568, 4294901760
    %570 = vmatpush1.msra.mxu0 %v569
    %571 = vmatprep.subr.mxu0 0.0
    %v572 = vand.u32 %v60, 4294901760
    %v573 = vsub.f32 %v60, %v572
    %v574 = vand.u32 %v573, 4294901760
    %575 = vmatpush1.msra.mxu0 %v574
    %576 = vmatprep.subr.mxu0 0.0
    %577 = vmatpush1.msra.mxu0 0.0
    %578 = vmatprep.subr.mxu0 0.0
    %579 = vmatpush1.msra.mxu0 0.0
    %580 = vmatprep.subr.mxu0 0.0
    %581 = vmatpush1.msra.mxu0 0.0
    %582 = vmatprep.subr.mxu0 0.0
    %583 = vmatpush1.msra.mxu0 0.0
    %584 = vmatprep.subr.mxu0 0.0
    %585 = vmatpush1.msra.mxu0 0.0
    %586 = vmatprep.subr.mxu0 0.0
    %587 = vmatpush1.msra.mxu0 0.0
    %588 = vmatprep.subr.mxu0 0.0
    %589 = vmatpush1.msra.mxu0 0.0
    %590 = vmatprep.subr.mxu0 0.0
    %591 = vmatpush1.msra.mxu0 0.0
    %592 = vmatprep.subr.mxu0 0.0
    %593 = vmatpush1.msra.mxu0 0.0
    %594 = vmatprep.subr.mxu0 0.0
    %595 = vmatpush1.msra.mxu0 0.0
    %596 = vmatprep.subr.mxu0 0.0
    %597 = vmatpush1.msra.mxu0 0.0
    %598 = vmatprep.subr.mxu0 0.0
    %599 = vmatpush1.msra.mxu0 0.0
    %600 = vmatprep.subr.mxu0 0.0
    %601 = vmatpush1.msra.mxu0 0.0
    %602 = vmatprep.subr.mxu0 0.0
    %603 = vmatpush1.msra.mxu0 0.0
    %604 = vmatprep.subr.mxu0 0.0
    %605 = vmatpush1.msra.mxu0 0.0
    %606 = vmatprep.subr.mxu0 0.0
    %607 = vmatpush1.msra.mxu0 0.0
    %608 = vmatprep.mubr.f32.mxu0 0.0
    %v609 = vand.u32 %v44, 4294901760
    %610 = vmatmul.mubr.f32.gmra.mrb[0].mxu0 %v609
    %v611 = vpop.f32.mrb[0].mxu0
    %v612 = vadd.f32 %v493, %v611
    %v613 = vpop.f32.mrb[0].mxu0
    %614 = vdwg.mxu0
    %615 = vmatprep.subr.mxu0 0.0
    %v616 = vand.u32 %v45, 4294901760
    %617 = vmatpush1.msra.mxu0 %v616
    %618 = vmatprep.subr.mxu0 0.0
    %v619 = vand.u32 %v46, 4294901760
    %620 = vmatpush1.msra.mxu0 %v619
    %621 = vmatprep.subr.mxu0 0.0
    %v622 = vand.u32 %v47, 4294901760
    %623 = vmatpush1.msra.mxu0 %v622
    %624 = vmatprep.subr.mxu0 0.0
    %v625 = vand.u32 %v48, 4294901760
    %626 = vmatpush1.msra.mxu0 %v625
    %627 = vmatprep.subr.mxu0 0.0
    %v628 = vand.u32 %v49, 4294901760
    %629 = vmatpush1.msra.mxu0 %v628
    %630 = vmatprep.subr.mxu0 0.0
    %v631 = vand.u32 %v50, 4294901760
    %632 = vmatpush1.msra.mxu0 %v631
    %633 = vmatprep.subr.mxu0 0.0
    %v634 = vand.u32 %v51, 4294901760
    %635 = vmatpush1.msra.mxu0 %v634
    %636 = vmatprep.subr.mxu0 0.0
    %v637 = vand.u32 %v52, 4294901760
    %638 = vmatpush1.msra.mxu0 %v637
    %639 = vmatprep.subr.mxu0 0.0
    %v640 = vand.u32 %v53, 4294901760
    %641 = vmatpush1.msra.mxu0 %v640
    %642 = vmatprep.subr.mxu0 0.0
    %v643 = vand.u32 %v54, 4294901760
    %644 = vmatpush1.msra.mxu0 %v643
    %645 = vmatprep.subr.mxu0 0.0
    %v646 = vand.u32 %v55, 4294901760
    %647 = vmatpush1.msra.mxu0 %v646
    %648 = vmatprep.subr.mxu0 0.0
    %v649 = vand.u32 %v56, 4294901760
    %650 = vmatpush1.msra.mxu0 %v649
    %651 = vmatprep.subr.mxu0 0.0
    %v652 = vand.u32 %v57, 4294901760
    %653 = vmatpush1.msra.mxu0 %v652
    %654 = vmatprep.subr.mxu0 0.0
    %v655 = vand.u32 %v58, 4294901760
    %656 = vmatpush1.msra.mxu0 %v655
    %657 = vmatprep.subr.mxu0 0.0
    %v658 = vand.u32 %v59, 4294901760
    %659 = vmatpush1.msra.mxu0 %v658
    %660 = vmatprep.subr.mxu0 0.0
    %v661 = vand.u32 %v60, 4294901760
    %662 = vmatpush1.msra.mxu0 %v661
    %663 = vmatprep.subr.mxu0 0.0
    %664 = vmatpush1.msra.mxu0 0.0
    %665 = vmatprep.subr.mxu0 0.0
    %666 = vmatpush1.msra.mxu0 0.0
    %667 = vmatprep.subr.mxu0 0.0
    %668 = vmatpush1.msra.mxu0 0.0
    %669 = vmatprep.subr.mxu0 0.0
    %670 = vmatpush1.msra.mxu0 0.0
    %671 = vmatprep.subr.mxu0 0.0
    %672 = vmatpush1.msra.mxu0 0.0
    %673 = vmatprep.subr.mxu0 0.0
    %674 = vmatpush1.msra.mxu0 0.0
    %675 = vmatprep.subr.mxu0 0.0
    %676 = vmatpush1.msra.mxu0 0.0
    %677 = vmatprep.subr.mxu0 0.0
    %678 = vmatpush1.msra.mxu0 0.0
    %679 = vmatprep.subr.mxu0 0.0
    %680 = vmatpush1.msra.mxu0 0.0
    %681 = vmatprep.subr.mxu0 0.0
    %682 = vmatpush1.msra.mxu0 0.0
    %683 = vmatprep.subr.mxu0 0.0
    %684 = vmatpush1.msra.mxu0 0.0
    %685 = vmatprep.subr.mxu0 0.0
    %686 = vmatpush1.msra.mxu0 0.0
    %687 = vmatprep.subr.mxu0 0.0
    %688 = vmatpush1.msra.mxu0 0.0
    %689 = vmatprep.subr.mxu0 0.0
    %690 = vmatpush1.msra.mxu0 0.0
    %691 = vmatprep.subr.mxu0 0.0
    %692 = vmatpush1.msra.mxu0 0.0
    %693 = vmatprep.subr.mxu0 0.0
    %694 = vmatpush1.msra.mxu0 0.0
    %695 = vmatprep.mubr.f32.mxu0 0.0
    %v696 = vand.u32 %v44, 4294901760
    %697 = vmatmul.mubr.f32.gmra.mrb[0].mxu0 %v696
    %v698 = vpop.f32.mrb[0].mxu0
    %v699 = vadd.f32 %v612, %v698
    %v700 = vpop.f32.mrb[0].mxu0
    %701 = vdwg.mxu0
    %v702 = vadd.f32 %v43, %v699
    %703 = vst [vmem:[#allocation7] sm:$0xff] %v702
    // Predicated region
    $region22: #{tpu_custom_call.1} parent=1 // pred_check
      _
    $region23: #{tpu_custom_call.1} parent=1 // pred_check_branch
      %705 = sbr.rel (0) target = $region25
    $region24: #{tpu_custom_call.1} parent=1 // pred_region
      %s707 = ssub.s32 128, 128
      %708 = vsyncadd [#allocation4], %s707
      %s710 = sshll.u32 [#allocation7], 4
      %s711 = int_to_ptr.vmem [resolvable:$true] %s710
      %713 = dma.vmem_to_hbm [thread:$0]  %s711, 128, %s2, [#allocation4]
    $region25: #{tpu_custom_call.1} parent=1 // pred_fallthru
      _
    // Predicated region
    $region26: #{tpu_custom_call.1} parent=1 // pred_check
      _
    $region27: #{tpu_custom_call.1} parent=1 // pred_check_branch
      %715 = sbr.rel (0) target = $region29
    $region28: #{tpu_custom_call.1} parent=1 // pred_region
      %716 = dma.done [#allocation4], 128
    $region29: #{tpu_custom_call.1} parent=1 // pred_fallthru
      _
    %717 = vsyncpa [#allocation3], 1
    %718 = vsyncpa [#allocation6], 1
    %719 = vsyncpa [#allocation4], 1

</llo_original>
